<compile_context>
chip_gen: v7x
topology: tpu7x:2x2x1
jax: 0.10.0
libtpu: 0.0.40
codegen_flags: <defaults>
</compile_context>

<pallas_src>
import math

import jax
import jax.numpy as jnp
import numpy as np
from jax.experimental import pallas as pl
from jax.experimental.pallas import tpu as pltpu


# ---------------------------------------------------------------------------
# Gaussian window helpers (host-side, numpy)
# ---------------------------------------------------------------------------
def _gaussian_1d(window_size: int, sigma: float) -> np.ndarray:
    g = np.array(
        [math.exp(-((x - window_size // 2) ** 2) / float(2 * sigma ** 2))
         for x in range(window_size)],
        dtype=np.float64,
    )
    return (g / g.sum()).astype(np.float32)


def _band_matrix(n: int, w1d: np.ndarray) -> np.ndarray:
    """Banded Toeplitz factor of the separable zero-padded 'same' conv.

    (M @ x)[r, :] = sum_j w1d[j] * x[r + j - pad, :]   (zero outside), which
    reproduces F.conv2d(..., padding=win//2) boundary handling exactly.
    """
    win = len(w1d)
    pad = win // 2
    m = np.zeros((n, n), np.float32)
    for r in range(n):
        for j in range(win):
            c = r + j - pad
            if 0 <= c < n:
                m[r, c] = w1d[j]
    return m


def _block_diag(mat: np.ndarray, k: int) -> np.ndarray:
    n = mat.shape[0]
    out = np.zeros((k * n, k * n), np.float32)
    for i in range(k):
        out[i * n:(i + 1) * n, i * n:(i + 1) * n] = mat
    return out


# ---------------------------------------------------------------------------
# Pallas kernel
# ---------------------------------------------------------------------------
def _make_kernel(tn_g: int, H: int, kW: int, charb_eps: float):
    c1 = np.float32(0.01 ** 2)
    c2 = np.float32(0.03 ** 2)
    eps2 = np.float32(charb_eps * charb_eps)
    nst = 5 * tn_g  # five conv inputs stacked along the plane-group axis

    def kernel(pred_ref, gt_ref, bh_ref, bw_ref, charb_ref, ssim_ref):
        # Native-dtype inputs; cast to f32 inside the kernel.
        p = pred_ref[...].astype(jnp.float32)        # (tn_g, H, kW)
        g = gt_ref[...].astype(jnp.float32)

        # ---- Charbonnier partial sum -----------------------------------
        d = p - g
        charb_sum = jnp.sum(jnp.sqrt(d * d + eps2))

        bh = bh_ref[...]                             # (H, H)   vertical band
        bw = bw_ref[...]                             # (kW, kW) horizontal band (block-diag)

        # ---- separable Gaussian conv on the MXU --------------------------
        # Stack the five conv inputs along the leading axis and run the
        # horizontal pass as ONE 2-D matmul (M = 5*tn_g*H, lane-dense K=N=kW).
        st = jnp.concatenate([p, g, p * p, g * g, p * g], axis=0)   # (5*tn_g, H, kW)
        th = jnp.dot(st.reshape(nst * H, kW), bw,
                     preferred_element_type=jnp.float32)            # (5*tn_g*H, kW)
        th = th.reshape(nst, H, kW)

        # Vertical pass: shared (H,H) band matrix, one clean 2-D matmul per
        # (H, kW) slice -- no broadcast_to, no per-plane band-matrix copies.
        conv = [jnp.dot(bh, th[q], preferred_element_type=jnp.float32)
                for q in range(nst)]                                 # 5*tn_g x (H, kW)

        # ---- SSIM map + partial sum (f32, EUP reciprocal) -----------------
        ssim_sum = jnp.float32(0.0)
        for j in range(tn_g):
            mu1 = conv[0 * tn_g + j]
            mu2 = conv[1 * tn_g + j]
            e11 = conv[2 * tn_g + j]
            e22 = conv[3 * tn_g + j]
            e12 = conv[4 * tn_g + j]
            mu1_sq = mu1 * mu1
            mu2_sq = mu2 * mu2
            mu1_mu2 = mu1 * mu2
            s11 = e11 - mu1_sq
            s22 = e22 - mu2_sq
            s12 = e12 - mu1_mu2
            num = (2.0 * mu1_mu2 + c1) * (2.0 * s12 + c2)
            den = (mu1_sq + mu2_sq + c1) * (s11 + s22 + c2)
            ssim_sum = ssim_sum + jnp.sum(num * pl.reciprocal(den, approx=True))

        charb_ref[...] = charb_sum.reshape(1, 1, 1)
        ssim_ref[...] = ssim_sum.reshape(1, 1, 1)

    return kernel


# ---------------------------------------------------------------------------
# Tiling / VMEM budgeting
# ---------------------------------------------------------------------------
def _vmem_capacity_bytes() -> int:
    try:
        info = pltpu.get_tpu_info()
        cap = getattr(info, "vmem_capacity_bytes", None)
        if cap:
            return int(cap)
    except Exception:
        pass
    try:
        kind = jax.devices()[0].device_kind.lower()
        if any(t in kind for t in ("v4", "v5", "v6")):
            return 128 * 1024 * 1024
    except Exception:
        pass
    return 64 * 1024 * 1024  # conservative default (v7x: 64 MiB per TensorCore)


def _largest_divisor_at_most(n: int, cap: int) -> int:
    cap = max(1, min(n, cap))
    for div in range(cap, 0, -1):
        if n % div == 0:
            return div
    return 1


def _pick_tiling(N_g: int, H: int, kW: int, in_bytes: int):
    capacity = _vmem_capacity_bytes()
    vmem_limit = (capacity * 27) // 32            # ~84% of physical VMEM
    # Fixed cost: band matrices are double-buffered by the default pipeline.
    # TODO(synk): single-buffer them (pl.Buffered(1)) once that path is proven.
    fixed = 2 * 2 * 4 * (H * H + kW * kW)
    # Per plane-group live set: ~18 f32 temporaries of size H*kW (cast inputs,
    # products, stacked buffer, both conv passes, ssim tail) plus the
    # double-buffered native-dtype input blocks.  No extra //2 discount.
    per_group = (18 * 4 + 2 * 2 * in_bytes) * H * kW
    budget = vmem_limit - fixed - 4 * 1024 * 1024
    cap = max(1, budget // max(per_group, 1))
    cap = min(cap, 8)                             # bounds in-kernel unrolling
    if N_g >= 2:
        cap = min(cap, max(1, N_g // 2))          # grid >= 2: both v7x TCs busy
    tn_g = _largest_divisor_at_most(N_g, cap)
    return int(tn_g), int(vmem_limit)


# ---------------------------------------------------------------------------
# Wrapper (matches the PyTorch HybridCharbonnierSSIM forward)
# ---------------------------------------------------------------------------
def hybrid_charbonnier_ssim(pred, gt, weighted_r=(1.0, 1.0),
                            win_size=11, win_sigma=1.5, charb_eps=1e-4):
    """Returns (loss, {'charbonnier': ..., 'ssim': ...}); each dict entry already
    includes its weight, matching the PyTorch LossWarpper semantics."""
    B, C, H, W = pred.shape
    N = B * C
    w1d = _gaussian_1d(win_size, win_sigma)

    # Lane packing for small images: pack k planes side-by-side in the lane
    # axis; the block-diagonal horizontal band keeps planes independent.
    k = _largest_divisor_at_most(N, max(1, -(-128 // W))) if W < 128 else 1
    N_g = N // k
    kW = k * W

    bh = jnp.asarray(_band_matrix(H, w1d))                      # (H, H)
    bw = jnp.asarray(_block_diag(_band_matrix(W, w1d).T, k))    # (kW, kW)

    def pack(x):
        x = x.reshape(N_g, k, H, W)
        x = jnp.transpose(x, (0, 2, 1, 3))        # one-time XLA layout change
        return x.reshape(N_g, H, kW)

    pred_p = pack(pred)       # native dtype; cast happens inside the kernel
    gt_p = pack(gt)

    in_bytes = max(pred.dtype.itemsize, gt.dtype.itemsize)
    tn_g, vmem_limit = _pick_tiling(N_g, H, kW, in_bytes)
    grid = N_g // tn_g                            # tn_g divides N_g

    kernel = _make_kernel(tn_g, H, kW, charb_eps)

    charb_parts, ssim_parts = pl.pallas_call(
        kernel,
        out_shape=(jax.ShapeDtypeStruct((grid, 1, 1), jnp.float32),
                   jax.ShapeDtypeStruct((grid, 1, 1), jnp.float32)),
        grid_spec=pltpu.PrefetchScalarGridSpec(
            num_scalar_prefetch=0,
            grid=(grid,),
            in_specs=[
                pl.BlockSpec((tn_g, H, kW), lambda i: (i, 0, 0)),
                pl.BlockSpec((tn_g, H, kW), lambda i: (i, 0, 0)),
                pl.BlockSpec((H, H), lambda i: (0, 0)),
                pl.BlockSpec((kW, kW), lambda i: (0, 0)),
            ],
            out_specs=(
                pl.BlockSpec((1, 1, 1), lambda i: (i, 0, 0)),
                pl.BlockSpec((1, 1, 1), lambda i: (i, 0, 0)),
            ),
        ),
        compiler_params=pltpu.CompilerParams(
            dimension_semantics=("parallel",),
            vmem_limit_bytes=vmem_limit,
        ),
    )(pred_p, gt_p, bh, bw)

    count = float(N * H * W)
    charb_mean = jnp.sum(charb_parts) / count
    ssim_mean = jnp.sum(ssim_parts) / count

    # LossWarpper semantics: per-loss value already includes its weight.
    l_charb = charb_mean * weighted_r[0]
    l_ssim = (1.0 - ssim_mean) * weighted_r[1]
    loss = l_charb + l_ssim
    return loss, {"charbonnier": l_charb, "ssim": l_ssim}


# ---------------------------------------------------------------------------
# Plain-JAX reference (gross-error sanity check only)
# ---------------------------------------------------------------------------
def _reference(pred, gt, weighted_r=(1.0, 1.0), win_size=11, win_sigma=1.5,
               charb_eps=1e-4):
    B, C, H, W = pred.shape
    pad = win_size // 2
    w1d = jnp.asarray(_gaussian_1d(win_size, win_sigma))
    p = pred.astype(jnp.float32).reshape(B * C, H, W)
    g = gt.astype(jnp.float32).reshape(B * C, H, W)
    charb = jnp.mean(jnp.sqrt((p - g) ** 2 + charb_eps * charb_eps))

    def conv(x):
        xp = jnp.pad(x, ((0, 0), (pad, pad), (pad, pad)))
        t = sum(w1d[j] * xp[:, :, j:j + W] for j in range(win_size))
        return sum(w1d[i] * t[:, i:i + H, :] for i in range(win_size))

    mu1, mu2 = conv(p), conv(g)
    s11 = conv(p * p) - mu1 * mu1
    s22 = conv(g * g) - mu2 * mu2
    s12 = conv(p * g) - mu1 * mu2
    c1, c2 = 0.01 ** 2, 0.03 ** 2
    ssim = jnp.mean(((2 * mu1 * mu2 + c1) * (2 * s12 + c2))
                    / ((mu1 * mu1 + mu2 * mu2 + c1) * (s11 + s22 + c2)))
    return charb * weighted_r[0] + (1.0 - ssim) * weighted_r[1]


if __name__ == "__main__":
    key = jax.random.PRNGKey(0)
    k1, k2 = jax.random.split(key)
    B, C, H, W = 2, 4, 16, 16
    pred = jax.random.uniform(k1, (B, C, H, W), dtype=jnp.float32)
    gt = jax.random.uniform(k2, (B, C, H, W), dtype=jnp.float32)

    loss, d = hybrid_charbonnier_ssim(pred, gt, weighted_r=(1.0, 1.0))
    jax.block_until_ready(loss)
    jax.block_until_ready(d["charbonnier"])
    jax.block_until_ready(d["ssim"])

    # Gross-error sanity check vs. plain JAX (loose tolerance: the kernel's
    # conv runs at MXU bf16-input precision with f32 accumulation and uses an
    # approximate EUP reciprocal; the reference is full-f32 on the VPU).
    ref_loss = _reference(pred, gt, weighted_r=(1.0, 1.0))
    if not (abs(float(loss) - float(ref_loss)) < 5e-2):
        raise AssertionError(
            f"kernel loss {float(loss):.6f} != reference {float(ref_loss):.6f}")

    print("KERNEL_OK")
</pallas_src>

<mosaic_0001>
module attributes {stable_mosaic.version = 11 : i64} {
  func.func @kernel(%arg0: i32, %arg1: memref<1x16x128xf32, #tpu.memory_space<vmem>>, %arg2: memref<1x16x128xf32, #tpu.memory_space<vmem>>, %arg3: memref<16x16xf32, #tpu.memory_space<vmem>>, %arg4: memref<128x128xf32, #tpu.memory_space<vmem>>, %arg5: memref<1x1x1xf32, #tpu.memory_space<vmem>>, %arg6: memref<1x1x1xf32, #tpu.memory_space<vmem>>) attributes {dimension_semantics = [#tpu.dimension_semantics<parallel>], iteration_bounds = array<i64: 1>, scalar_prefetch = 0 : i64, scratch_operands = 0 : i64, tpu.core_type = #tpu.core_type<tc>, window_params = [{transform_indices = @transform_0, window_bounds = array<i64: 1, 16, 128>}, {transform_indices = @transform_1, window_bounds = array<i64: 1, 16, 128>}, {pipeline_mode = #tpu.pipeline_mode<synchronous>, transform_indices = @transform_2, window_bounds = array<i64: 16, 16>}, {pipeline_mode = #tpu.pipeline_mode<synchronous>, transform_indices = @transform_3, window_bounds = array<i64: 128, 128>}, {transform_indices = @transform_4, window_bounds = array<i64: 1, 1, 1>}, {transform_indices = @transform_5, window_bounds = array<i64: 1, 1, 1>}]} {
    %c0 = arith.constant 0 : index
    %c0_0 = arith.constant 0 : index
    %c0_1 = arith.constant 0 : index
    %0 = vector.load %arg1[%c0, %c0_0, %c0_1] : memref<1x16x128xf32, #tpu.memory_space<vmem>>, vector<1x16x128xf32>
    %c0_2 = arith.constant 0 : index
    %c0_3 = arith.constant 0 : index
    %c0_4 = arith.constant 0 : index
    %1 = vector.load %arg2[%c0_2, %c0_3, %c0_4] : memref<1x16x128xf32, #tpu.memory_space<vmem>>, vector<1x16x128xf32>
    %2 = arith.subf %0, %1 : vector<1x16x128xf32>
    %3 = arith.mulf %2, %2 : vector<1x16x128xf32>
    %cst = arith.constant 9.99999993E-9 : f32
    %4 = vector.broadcast %cst : f32 to vector<1x16x128xf32>
    %5 = arith.addf %3, %4 : vector<1x16x128xf32>
    %6 = math.sqrt %5 : vector<1x16x128xf32>
    %7 = vector.shape_cast %6 : vector<1x16x128xf32> to vector<1x1x16x128xf32>
    %cst_5 = arith.constant dense<0.000000e+00> : vector<1xf32>
    %8 = vector.multi_reduction <add>, %7, %cst_5 [1, 2, 3] : vector<1x1x16x128xf32> to vector<1xf32>
    %9 = vector.shape_cast %8 : vector<1xf32> to vector<1x1x1x1xf32>
    %10 = vector.extract %9[0, 0, 0, 0] : f32 from vector<1x1x1x1xf32>
    %c0_6 = arith.constant 0 : index
    %c0_7 = arith.constant 0 : index
    %11 = vector.load %arg3[%c0_6, %c0_7] : memref<16x16xf32, #tpu.memory_space<vmem>>, vector<16x16xf32>
    %c0_8 = arith.constant 0 : index
    %c0_9 = arith.constant 0 : index
    %12 = vector.load %arg4[%c0_8, %c0_9] : memref<128x128xf32, #tpu.memory_space<vmem>>, vector<128x128xf32>
    %13 = arith.mulf %0, %0 : vector<1x16x128xf32>
    %14 = arith.mulf %1, %1 : vector<1x16x128xf32>
    %15 = arith.mulf %0, %1 : vector<1x16x128xf32>
    %16 = tpu.concatenate %0, %1, %13, %14, %15 in 0 : vector<1x16x128xf32>, vector<1x16x128xf32>, vector<1x16x128xf32>, vector<1x16x128xf32>, vector<1x16x128xf32> -> vector<5x16x128xf32>
    %17 = vector.shape_cast %16 : vector<5x16x128xf32> to vector<80x128xf32>
    %cst_10 = arith.constant dense<0.000000e+00> : vector<80x128xf32>
    %18 = tpu.matmul %17, %12, %cst_10 {dimension_numbers = #tpu.dot_dimension_numbers<[1], [0], [0], [1], [0, 0, 1, 1], [], []>} : vector<80x128xf32>, vector<128x128xf32>, vector<80x128xf32> -> vector<80x128xf32>
    %19 = vector.shape_cast %18 : vector<80x128xf32> to vector<5x16x128xf32>
    %20 = vector.extract_strided_slice %19 {offsets = [0, 0, 0], sizes = [1, 16, 128], strides = [1, 1, 1]} : vector<5x16x128xf32> to vector<1x16x128xf32>
    %21 = vector.shape_cast %20 : vector<1x16x128xf32> to vector<16x128xf32>
    %cst_11 = arith.constant dense<0.000000e+00> : vector<16x128xf32>
    %22 = tpu.matmul %11, %21, %cst_11 {dimension_numbers = #tpu.dot_dimension_numbers<[1], [0], [0], [1], [0, 0, 1, 1], [], []>} : vector<16x16xf32>, vector<16x128xf32>, vector<16x128xf32> -> vector<16x128xf32>
    %23 = vector.extract_strided_slice %19 {offsets = [1, 0, 0], sizes = [1, 16, 128], strides = [1, 1, 1]} : vector<5x16x128xf32> to vector<1x16x128xf32>
    %24 = vector.shape_cast %23 : vector<1x16x128xf32> to vector<16x128xf32>
    %cst_12 = arith.constant dense<0.000000e+00> : vector<16x128xf32>
    %25 = tpu.matmul %11, %24, %cst_12 {dimension_numbers = #tpu.dot_dimension_numbers<[1], [0], [0], [1], [0, 0, 1, 1], [], []>} : vector<16x16xf32>, vector<16x128xf32>, vector<16x128xf32> -> vector<16x128xf32>
    %26 = vector.extract_strided_slice %19 {offsets = [2, 0, 0], sizes = [1, 16, 128], strides = [1, 1, 1]} : vector<5x16x128xf32> to vector<1x16x128xf32>
    %27 = vector.shape_cast %26 : vector<1x16x128xf32> to vector<16x128xf32>
    %cst_13 = arith.constant dense<0.000000e+00> : vector<16x128xf32>
    %28 = tpu.matmul %11, %27, %cst_13 {dimension_numbers = #tpu.dot_dimension_numbers<[1], [0], [0], [1], [0, 0, 1, 1], [], []>} : vector<16x16xf32>, vector<16x128xf32>, vector<16x128xf32> -> vector<16x128xf32>
    %29 = vector.extract_strided_slice %19 {offsets = [3, 0, 0], sizes = [1, 16, 128], strides = [1, 1, 1]} : vector<5x16x128xf32> to vector<1x16x128xf32>
    %30 = vector.shape_cast %29 : vector<1x16x128xf32> to vector<16x128xf32>
    %cst_14 = arith.constant dense<0.000000e+00> : vector<16x128xf32>
    %31 = tpu.matmul %11, %30, %cst_14 {dimension_numbers = #tpu.dot_dimension_numbers<[1], [0], [0], [1], [0, 0, 1, 1], [], []>} : vector<16x16xf32>, vector<16x128xf32>, vector<16x128xf32> -> vector<16x128xf32>
    %32 = vector.extract_strided_slice %19 {offsets = [4, 0, 0], sizes = [1, 16, 128], strides = [1, 1, 1]} : vector<5x16x128xf32> to vector<1x16x128xf32>
    %33 = vector.shape_cast %32 : vector<1x16x128xf32> to vector<16x128xf32>
    %cst_15 = arith.constant dense<0.000000e+00> : vector<16x128xf32>
    %34 = tpu.matmul %11, %33, %cst_15 {dimension_numbers = #tpu.dot_dimension_numbers<[1], [0], [0], [1], [0, 0, 1, 1], [], []>} : vector<16x16xf32>, vector<16x128xf32>, vector<16x128xf32> -> vector<16x128xf32>
    %35 = arith.mulf %22, %22 : vector<16x128xf32>
    %36 = arith.mulf %25, %25 : vector<16x128xf32>
    %37 = arith.mulf %22, %25 : vector<16x128xf32>
    %38 = arith.subf %28, %35 : vector<16x128xf32>
    %39 = arith.subf %31, %36 : vector<16x128xf32>
    %40 = arith.subf %34, %37 : vector<16x128xf32>
    %cst_16 = arith.constant 2.000000e+00 : f32
    %41 = vector.broadcast %cst_16 : f32 to vector<16x128xf32>
    %42 = arith.mulf %41, %37 : vector<16x128xf32>
    %cst_17 = arith.constant 9.99999974E-5 : f32
    %43 = vector.broadcast %cst_17 : f32 to vector<16x128xf32>
    %44 = arith.addf %42, %43 : vector<16x128xf32>
    %cst_18 = arith.constant 2.000000e+00 : f32
    %45 = vector.broadcast %cst_18 : f32 to vector<16x128xf32>
    %46 = arith.mulf %45, %40 : vector<16x128xf32>
    %cst_19 = arith.constant 8.99999984E-4 : f32
    %47 = vector.broadcast %cst_19 : f32 to vector<16x128xf32>
    %48 = arith.addf %46, %47 : vector<16x128xf32>
    %49 = arith.mulf %44, %48 : vector<16x128xf32>
    %50 = arith.addf %35, %36 : vector<16x128xf32>
    %cst_20 = arith.constant 9.99999974E-5 : f32
    %51 = vector.broadcast %cst_20 : f32 to vector<16x128xf32>
    %52 = arith.addf %50, %51 : vector<16x128xf32>
    %53 = arith.addf %38, %39 : vector<16x128xf32>
    %cst_21 = arith.constant 8.99999984E-4 : f32
    %54 = vector.broadcast %cst_21 : f32 to vector<16x128xf32>
    %55 = arith.addf %53, %54 : vector<16x128xf32>
    %56 = arith.mulf %52, %55 : vector<16x128xf32>
    %57 = tpu.reciprocal %56 {approx = true} : vector<16x128xf32> -> vector<16x128xf32>
    %58 = arith.mulf %49, %57 : vector<16x128xf32>
    %59 = vector.shape_cast %58 : vector<16x128xf32> to vector<1x16x128xf32>
    %cst_22 = arith.constant dense<0.000000e+00> : vector<1xf32>
    %60 = vector.multi_reduction <add>, %59, %cst_22 [1, 2] : vector<1x16x128xf32> to vector<1xf32>
    %61 = vector.shape_cast %60 : vector<1xf32> to vector<1x1x1xf32>
    %62 = vector.extract %61[0, 0, 0] : f32 from vector<1x1x1xf32>
    %cst_23 = arith.constant 0.000000e+00 : f32
    %63 = arith.addf %cst_23, %62 : f32
    %64 = vector.broadcast %10 : f32 to vector<1x1x1xf32>
    %c0_24 = arith.constant 0 : index
    %c0_25 = arith.constant 0 : index
    %c0_26 = arith.constant 0 : index
    %65 = vector.load %arg5[%c0_24, %c0_25, %c0_26] : memref<1x1x1xf32, #tpu.memory_space<vmem>>, vector<1x1x1xf32>
    tpu.vector_store %arg5[%c0_24, %c0_25, %c0_26], %64 {strides = array<i32>} : memref<1x1x1xf32, #tpu.memory_space<vmem>>, vector<1x1x1xf32>,
    %66 = vector.broadcast %63 : f32 to vector<1x1x1xf32>
    %c0_27 = arith.constant 0 : index
    %c0_28 = arith.constant 0 : index
    %c0_29 = arith.constant 0 : index
    %67 = vector.load %arg6[%c0_27, %c0_28, %c0_29] : memref<1x1x1xf32, #tpu.memory_space<vmem>>, vector<1x1x1xf32>
    tpu.vector_store %arg6[%c0_27, %c0_28, %c0_29], %66 {strides = array<i32>} : memref<1x1x1xf32, #tpu.memory_space<vmem>>, vector<1x1x1xf32>,
    return
  }
  func.func @transform_0(%arg0: i32) -> (i32, i32, i32) {
    %c0_i32 = arith.constant 0 : i32
    %c0_i32_0 = arith.constant 0 : i32
    %c0_i32_1 = arith.constant 0 : i32
    return %arg0, %c0_i32, %c0_i32_0 : i32, i32, i32
  }
  func.func @transform_1(%arg0: i32) -> (i32, i32, i32) {
    %c0_i32 = arith.constant 0 : i32
    %c0_i32_0 = arith.constant 0 : i32
    %c0_i32_1 = arith.constant 0 : i32
    return %arg0, %c0_i32, %c0_i32_0 : i32, i32, i32
  }
  func.func @transform_2(%arg0: i32) -> (i32, i32) {
    %c0_i32 = arith.constant 0 : i32
    %c0_i32_0 = arith.constant 0 : i32
    %c0_i32_1 = arith.constant 0 : i32
    return %c0_i32, %c0_i32_0 : i32, i32
  }
  func.func @transform_3(%arg0: i32) -> (i32, i32) {
    %c0_i32 = arith.constant 0 : i32
    %c0_i32_0 = arith.constant 0 : i32
    %c0_i32_1 = arith.constant 0 : i32
    return %c0_i32, %c0_i32_0 : i32, i32
  }
  func.func @transform_4(%arg0: i32) -> (i32, i32, i32) {
    %c0_i32 = arith.constant 0 : i32
    %c0_i32_0 = arith.constant 0 : i32
    %c0_i32_1 = arith.constant 0 : i32
    return %arg0, %c0_i32, %c0_i32_0 : i32, i32, i32
  }
  func.func @transform_5(%arg0: i32) -> (i32, i32, i32) {
    %c0_i32 = arith.constant 0 : i32
    %c0_i32_0 = arith.constant 0 : i32
    %c0_i32_1 = arith.constant 0 : i32
    return %arg0, %c0_i32, %c0_i32_0 : i32, i32, i32
  }
}

</mosaic_0001>

<llo_original>
// kernel: tpu_custom_call.1
$region0: #{tpu_custom_call.1}
  #allocation0 [shape = 'u32[]', space=smem, size = 0x4, offset = 0x4, fixed_abs, tag = 'smem constant byte address 0x4 - core index']
  #allocation1 [shape = 'u32[144,128]{1,0:T(1,128)}', space=vmem, size = 0x12000, scoped, tag = 'internal scratch']
  %s0 = inlined_call_operand.hbm [shape: f32[1,16,128], index: 0, kind: input, shape index: {}]
  %s1 = inlined_call_operand.hbm [shape: f32[1,16,128], index: 1, kind: input, shape index: {}]
  %s2 = inlined_call_operand.hbm [shape: f32[16,16], index: 2, kind: input, shape index: {}]
  %s3 = inlined_call_operand.hbm [shape: f32[128,128], index: 3, kind: input, shape index: {}]
  %s4 = inlined_call_operand.hbm [shape: f32[1,1,1], index: 4, kind: output, shape index: {0}]
  %s5 = inlined_call_operand.hbm [shape: f32[1,1,1], index: 5, kind: output, shape index: {1}]
  %6 = xla_tuple %s4, %s5
  %s7 = sld [smem:[#allocation0]]
  $region50: #{tpu_custom_call.1} parent=0
    _
  %s9 = ssub.s32 1, %s7
  %s10 = scalar_select 0, %s9, %s7
  $region1: #{tpu_custom_call.1} parent=0
    #allocation2 [shape = 'u8[8192]{0}', space=vmem, size = 0x2000, scoped, tag = 'input window, operand 0, single buffered']
    #allocation3 [shape = 's32[1]{0}', space=sflag, size = 0x4, scoped, tag = 'scoped memory for tpu_custom_call.1']
    #allocation4 [shape = 's32[1]{0}', space=sflag, size = 0x4, scoped, tag = 'scoped memory for tpu_custom_call.1']
    #allocation5 [shape = 'u8[8192]{0}', space=vmem, size = 0x2000, scoped, tag = 'input window, operand 1, single buffered']
    #allocation6 [shape = 's32[1]{0}', space=sflag, size = 0x4, scoped, tag = 'scoped memory for tpu_custom_call.1']
    #allocation7 [shape = 'u8[8192]{0}', space=vmem, size = 0x2000, scoped, tag = 'input window, operand 2, single buffered']
    #allocation8 [shape = 'u8[65536]{0}', space=vmem, size = 0x10000, scoped, tag = 'input window, operand 3, single buffered']
    #allocation9 [shape = 's32[1]{0}', space=sflag, size = 0x4, scoped, tag = 'scoped memory for tpu_custom_call.1']
    #allocation10 [shape = 'u8[512]{0}', space=vmem, size = 0x400, scoped, tag = 'output window, operand 0, single buffered']
    #allocation11 [shape = 'u8[512]{0}', space=vmem, size = 0x400, scoped, tag = 'output window, operand 1, single buffered']
    #allocation12 [shape = 's32[1]{0}', space=sflag, size = 0x4, scoped, tag = 'scoped memory for tpu_custom_call.1']
    %11 = vsyncpa [#allocation3], 0
    %12 = vsyncpa [#allocation6], 0
    %13 = vsyncpa [#allocation9], 0
    %14 = vsyncpa [#allocation4], 0
    %15 = vsyncpa [#allocation12], 0
    // Predicated region
    $region2: #{tpu_custom_call.1} parent=1 // pred_check
      _
    $region3: #{tpu_custom_call.1} parent=1 // pred_check_branch
      %17 = sbr.rel (0) target = $region5
    $region4: #{tpu_custom_call.1} parent=1 // pred_region
      %s19 = ssub.s32 256, 256
      %20 = vsyncadd [#allocation3], %s19
      %s21 = sshll.u32 [#allocation2], 4
      %s22 = int_to_ptr.vmem [resolvable:$true] %s21
      %27 = dma.hbm_to_vmem [thread:$0]  %s0, 256, %s22, [#allocation3], 128, 128, 8
    $region5: #{tpu_custom_call.1} parent=1 // pred_fallthru
      _
    // Predicated region
    $region6: #{tpu_custom_call.1} parent=1 // pred_check
      _
    $region7: #{tpu_custom_call.1} parent=1 // pred_check_branch
      %29 = sbr.rel (0) target = $region9
    $region8: #{tpu_custom_call.1} parent=1 // pred_region
      %s31 = ssub.s32 256, 256
      %32 = vsyncadd [#allocation6], %s31
      %s33 = sshll.u32 [#allocation5], 4
      %s34 = int_to_ptr.vmem [resolvable:$true] %s33
      %39 = dma.hbm_to_vmem [thread:$0]  %s1, 256, %s34, [#allocation6], 128, 128, 8
    $region9: #{tpu_custom_call.1} parent=1 // pred_fallthru
      _
    // Predicated region
    $region10: #{tpu_custom_call.1} parent=1 // pred_check
      _
    $region11: #{tpu_custom_call.1} parent=1 // pred_check_branch
      %41 = sbr.rel (0) target = $region13
    $region12: #{tpu_custom_call.1} parent=1 // pred_region
      %s43 = ssub.s32 256, 256
      %44 = vsyncadd [#allocation6], %s43
      %s45 = sshll.u32 [#allocation7], 4
      %s46 = int_to_ptr.vmem [resolvable:$true] %s45
      %51 = dma.hbm_to_vmem [thread:$0]  %s2, 256, %s46, [#allocation6], 128, 128, 8
    $region13: #{tpu_custom_call.1} parent=1 // pred_fallthru
      _
    // Predicated region
    $region14: #{tpu_custom_call.1} parent=1 // pred_check
      _
    $region15: #{tpu_custom_call.1} parent=1 // pred_check_branch
      %53 = sbr.rel (0) target = $region17
    $region16: #{tpu_custom_call.1} parent=1 // pred_region
      %s55 = ssub.s32 2048, 2048
      %56 = vsyncadd [#allocation9], %s55
      %s57 = sshll.u32 [#allocation8], 4
      %s58 = int_to_ptr.vmem [resolvable:$true] %s57
      %63 = dma.hbm_to_vmem [thread:$0]  %s3, 2048, %s58, [#allocation9], 128, 128, 8
    $region17: #{tpu_custom_call.1} parent=1 // pred_fallthru
      _
    // Predicated region
    $region18: #{tpu_custom_call.1} parent=1 // pred_check
      _
    $region19: #{tpu_custom_call.1} parent=1 // pred_check_branch
      %65 = sbr.rel (0) target = $region21
    $region20: #{tpu_custom_call.1} parent=1 // pred_region
      %66 = dma.done [#allocation3], 256
    $region21: #{tpu_custom_call.1} parent=1 // pred_fallthru
      _
    // Predicated region
    $region22: #{tpu_custom_call.1} parent=1 // pred_check
      _
    $region23: #{tpu_custom_call.1} parent=1 // pred_check_branch
      %68 = sbr.rel (0) target = $region25
    $region24: #{tpu_custom_call.1} parent=1 // pred_region
      %69 = dma.done [#allocation6], 256
    $region25: #{tpu_custom_call.1} parent=1 // pred_fallthru
      _
    // Predicated region
    $region26: #{tpu_custom_call.1} parent=1 // pred_check
      _
    $region27: #{tpu_custom_call.1} parent=1 // pred_check_branch
      %71 = sbr.rel (0) target = $region29
    $region28: #{tpu_custom_call.1} parent=1 // pred_region
      %72 = dma.done [#allocation6], 256
    $region29: #{tpu_custom_call.1} parent=1 // pred_fallthru
      _
    // Predicated region
    $region30: #{tpu_custom_call.1} parent=1 // pred_check
      _
    $region31: #{tpu_custom_call.1} parent=1 // pred_check_branch
      %74 = sbr.rel (0) target = $region33
    $region32: #{tpu_custom_call.1} parent=1 // pred_region
      %75 = dma.done [#allocation9], 2048
    $region33: #{tpu_custom_call.1} parent=1 // pred_fallthru
      _
    %v76 = vld [vmem:[#allocation2] sm:$0xff]
    %v77 = vld [vmem:[#allocation2 + $0x8] sm:$0xff]
    %v78 = vld [vmem:[#allocation5] sm:$0xff]
    %v79 = vld [vmem:[#allocation5 + $0x8] sm:$0xff]
    %v80 = vsub.f32 %v76, %v78
    %v81 = vsub.f32 %v77, %v79
    %v82 = vmul.f32 %v80, %v80
    %v83 = vmul.f32 %v81, %v81
    %v84 = vadd.f32 %v82, 1e-08
    %v85 = vadd.f32 %v83, 1e-08
    %v86 = vrsqrt.pop %v84
    %v87 = vmul.f32 %v84, %v86
    %vm88 = vcmp.eq.f32.partialorder %v84, inf
    %v89 = vsel %vm88, %v84, %v87
    %vm90 = vcmp.eq.f32.partialorder %v84, 0.0
    %v91 = vand.u32 %v84, 2147483648
    %v92 = vsel %vm90, %v91, %v89
    %v93 = vrsqrt.pop %v85
    %v94 = vmul.f32 %v85, %v93
    %vm95 = vcmp.eq.f32.partialorder %v85, inf
    %v96 = vsel %vm95, %v85, %v94
    %vm97 = vcmp.eq.f32.partialorder %v85, 0.0
    %v98 = vand.u32 %v85, 2147483648
    %v99 = vsel %vm97, %v98, %v96
    %v100 = vadd.f32 %v92, %v99
    %101 = vadd.xlane.f32.xlu0 %v100
    %v102 = vpop.xlane.xlu0 %101
    %v103 = vrot.slane %v102, 4
    %v104 = vadd.f32 %v102, %v103
    %v105 = vrot.slane %v104, 2
    %v106 = vadd.f32 %v104, %v105
    %v107 = vrot.slane %v106, 1
    %v108 = vadd.f32 %v106, %v107
    %s109 = vtos %v108
    %v110 = vld [vmem:[#allocation7] sm:$0xff]
    %v111 = vld [vmem:[#allocation7 + $0x8] sm:$0xff]
    %v112 = vld [vmem:[#allocation8] sm:$0xff]
    %v113 = vld [vmem:[#allocation8 + $0x8] sm:$0xff]
    %v114 = vld [vmem:[#allocation8 + $0x10] sm:$0xff]
    %v115 = vld [vmem:[#allocation8 + $0x18] sm:$0xff]
    %v116 = vld [vmem:[#allocation8 + $0x20] sm:$0xff]
    %v117 = vld [vmem:[#allocation8 + $0x28] sm:$0xff]
    %v118 = vld [vmem:[#allocation8 + $0x30] sm:$0xff]
    %v119 = vld [vmem:[#allocation8 + $0x38] sm:$0xff]
    %v120 = vld [vmem:[#allocation8 + $0x40] sm:$0xff]
    %v121 = vld [vmem:[#allocation8 + $0x48] sm:$0xff]
    %v122 = vld [vmem:[#allocation8 + $0x50] sm:$0xff]
    %v123 = vld [vmem:[#allocation8 + $0x58] sm:$0xff]
    %v124 = vld [vmem:[#allocation8 + $0x60] sm:$0xff]
    %v125 = vld [vmem:[#allocation8 + $0x68] sm:$0xff]
    %v126 = vld [vmem:[#allocation8 + $0x70] sm:$0xff]
    %v127 = vld [vmem:[#allocation8 + $0x78] sm:$0xff]
    %v128 = vmul.f32 %v76, %v76
    %v129 = vmul.f32 %v77, %v77
    %v130 = vmul.f32 %v78, %v78
    %v131 = vmul.f32 %v79, %v79
    %v132 = vmul.f32 %v76, %v78
    %v133 = vmul.f32 %v77, %v79
    %134 = vmatprep.subr.mxu0 0.0
    %135 = vmatpush1.msra.mxu0 %v112
    %136 = vmatprep.subr.mxu0 0.0
    %137 = vmatpush1.msra.mxu0 %v113
    %138 = vmatprep.subr.mxu0 0.0
    %139 = vmatpush1.msra.mxu0 %v114
    %140 = vmatprep.subr.mxu0 0.0
    %141 = vmatpush1.msra.mxu0 %v115
    %142 = vmatprep.subr.mxu0 0.0
    %143 = vmatpush1.msra.mxu0 %v116
    %144 = vmatprep.subr.mxu0 0.0
    %145 = vmatpush1.msra.mxu0 %v117
    %146 = vmatprep.subr.mxu0 0.0
    %147 = vmatpush1.msra.mxu0 %v118
    %148 = vmatprep.subr.mxu0 0.0
    %149 = vmatpush1.msra.mxu0 %v119
    %150 = vmatprep.subr.mxu0 0.0
    %151 = vmatpush1.msra.mxu0 %v120
    %152 = vmatprep.subr.mxu0 0.0
    %153 = vmatpush1.msra.mxu0 %v121
    %154 = vmatprep.subr.mxu0 0.0
    %155 = vmatpush1.msra.mxu0 %v122
    %156 = vmatprep.subr.mxu0 0.0
    %157 = vmatpush1.msra.mxu0 %v123
    %158 = vmatprep.subr.mxu0 0.0
    %159 = vmatpush1.msra.mxu0 %v124
    %160 = vmatprep.subr.mxu0 0.0
    %161 = vmatpush1.msra.mxu0 %v125
    %162 = vmatprep.subr.mxu0 0.0
    %163 = vmatpush1.msra.mxu0 %v126
    %164 = vmatprep.subr.mxu0 0.0
    %165 = vmatpush1.msra.mxu0 %v127
    %166 = vmatprep.subr.mxu0 0.0
    %167 = vmatpush1.msra.mxu0 0.0
    %168 = vmatprep.subr.mxu0 0.0
    %169 = vmatpush1.msra.mxu0 0.0
    %170 = vmatprep.subr.mxu0 0.0
    %171 = vmatpush1.msra.mxu0 0.0
    %172 = vmatprep.subr.mxu0 0.0
    %173 = vmatpush1.msra.mxu0 0.0
    %174 = vmatprep.subr.mxu0 0.0
    %175 = vmatpush1.msra.mxu0 0.0
    %176 = vmatprep.subr.mxu0 0.0
    %177 = vmatpush1.msra.mxu0 0.0
    %178 = vmatprep.subr.mxu0 0.0
    %179 = vmatpush1.msra.mxu0 0.0
    %180 = vmatprep.subr.mxu0 0.0
    %181 = vmatpush1.msra.mxu0 0.0
    %182 = vmatprep.subr.mxu0 0.0
    %183 = vmatpush1.msra.mxu0 0.0
    %184 = vmatprep.subr.mxu0 0.0
    %185 = vmatpush1.msra.mxu0 0.0
    %186 = vmatprep.subr.mxu0 0.0
    %187 = vmatpush1.msra.mxu0 0.0
    %188 = vmatprep.subr.mxu0 0.0
    %189 = vmatpush1.msra.mxu0 0.0
    %190 = vmatprep.subr.mxu0 0.0
    %191 = vmatpush1.msra.mxu0 0.0
    %192 = vmatprep.subr.mxu0 0.0
    %193 = vmatpush1.msra.mxu0 0.0
    %194 = vmatprep.subr.mxu0 0.0
    %195 = vmatpush1.msra.mxu0 0.0
    %196 = vmatprep.subr.mxu0 0.0
    %197 = vmatpush1.msra.mxu0 0.0
    %198 = vmatprep.mubr.f32.mxu0 0.0
    %199 = vmatmul.mubr.f32.gmra.mrb[0].mxu0 %v76
    %v200 = vpop.f32.mrb[0].mxu0
    %v201 = vadd.f32 0.0, %v200
    %v202 = vpop.f32.mrb[0].mxu0
    %203 = vmatprep.mubr.f32.mxu0 0.0
    %204 = vmatmul.mubr.f32.gmra.mrb[0].mxu0 %v77
    %v205 = vpop.f32.mrb[0].mxu0
    %v206 = vadd.f32 0.0, %v205
    %v207 = vpop.f32.mrb[0].mxu0
    %208 = vmatprep.mubr.f32.mxu0 0.0
    %209 = vmatmul.mubr.f32.gmra.mrb[0].mxu0 %v78
    %v210 = vpop.f32.mrb[0].mxu0
    %v211 = vadd.f32 0.0, %v210
    %v212 = vpop.f32.mrb[0].mxu0
    %213 = vmatprep.mubr.f32.mxu0 0.0
    %214 = vmatmul.mubr.f32.gmra.mrb[0].mxu0 %v79
    %v215 = vpop.f32.mrb[0].mxu0
    %v216 = vadd.f32 0.0, %v215
    %v217 = vpop.f32.mrb[0].mxu0
    %218 = vmatprep.mubr.f32.mxu0 0.0
    %219 = vmatmul.mubr.f32.gmra.mrb[0].mxu0 %v128
    %v220 = vpop.f32.mrb[0].mxu0
    %v221 = vadd.f32 0.0, %v220
    %v222 = vpop.f32.mrb[0].mxu0
    %223 = vmatprep.mubr.f32.mxu0 0.0
    %224 = vmatmul.mubr.f32.gmra.mrb[0].mxu0 %v129
    %v225 = vpop.f32.mrb[0].mxu0
    %v226 = vadd.f32 0.0, %v225
    %v227 = vpop.f32.mrb[0].mxu0
    %228 = vmatprep.mubr.f32.mxu0 0.0
    %229 = vmatmul.mubr.f32.gmra.mrb[0].mxu0 %v130
    %v230 = vpop.f32.mrb[0].mxu0
    %v231 = vadd.f32 0.0, %v230
    %v232 = vpop.f32.mrb[0].mxu0
    %233 = vmatprep.mubr.f32.mxu0 0.0
    %234 = vmatmul.mubr.f32.gmra.mrb[0].mxu0 %v131
    %v235 = vpop.f32.mrb[0].mxu0
    %v236 = vadd.f32 0.0, %v235
    %v237 = vpop.f32.mrb[0].mxu0
    %238 = vmatprep.mubr.f32.mxu0 0.0
    %239 = vmatmul.mubr.f32.gmra.mrb[0].mxu0 %v132
    %v240 = vpop.f32.mrb[0].mxu0
    %v241 = vadd.f32 0.0, %v240
    %v242 = vpop.f32.mrb[0].mxu0
    %243 = vmatprep.mubr.f32.mxu0 0.0
    %244 = vmatmul.mubr.f32.gmra.mrb[0].mxu0 %v133
    %v245 = vpop.f32.mrb[0].mxu0
    %v246 = vadd.f32 0.0, %v245
    %v247 = vpop.f32.mrb[0].mxu0
    %248 = vdwg.mxu0
    %vm249 = vcmask 130048
    %v251 = vsel %vm249, %v110, 0
    %v254 = vsel %vm249, %v111, 0
    %256 = vmatprep.subr.mxu0 0.0
    %257 = vmatpush1.msra.mxu0 %v201
    %258 = vmatprep.subr.mxu0 0.0
    %259 = vmatpush1.msra.mxu0 %v206
    %260 = vmatprep.subr.mxu0 0.0
    %261 = vmatpush1.msra.mxu0 0.0
    %262 = vmatprep.subr.mxu0 0.0
    %263 = vmatpush1.msra.mxu0 0.0
    %264 = vmatprep.subr.mxu0 0.0
    %265 = vmatpush1.msra.mxu0 0.0
    %266 = vmatprep.subr.mxu0 0.0
    %267 = vmatpush1.msra.mxu0 0.0
    %268 = vmatprep.subr.mxu0 0.0
    %269 = vmatpush1.msra.mxu0 0.0
    %270 = vmatprep.subr.mxu0 0.0
    %271 = vmatpush1.msra.mxu0 0.0
    %272 = vmatprep.subr.mxu0 0.0
    %273 = vmatpush1.msra.mxu0 0.0
    %274 = vmatprep.subr.mxu0 0.0
    %275 = vmatpush1.msra.mxu0 0.0
    %276 = vmatprep.subr.mxu0 0.0
    %277 = vmatpush1.msra.mxu0 0.0
    %278 = vmatprep.subr.mxu0 0.0
    %279 = vmatpush1.msra.mxu0 0.0
    %280 = vmatprep.subr.mxu0 0.0
    %281 = vmatpush1.msra.mxu0 0.0
    %282 = vmatprep.subr.mxu0 0.0
    %283 = vmatpush1.msra.mxu0 0.0
    %284 = vmatprep.subr.mxu0 0.0
    %285 = vmatpush1.msra.mxu0 0.0
    %286 = vmatprep.subr.mxu0 0.0
    %287 = vmatpush1.msra.mxu0 0.0
    %288 = vmatprep.subr.mxu0 0.0
    %289 = vmatpush1.msra.mxu0 0.0
    %290 = vmatprep.subr.mxu0 0.0
    %291 = vmatpush1.msra.mxu0 0.0
    %292 = vmatprep.subr.mxu0 0.0
    %293 = vmatpush1.msra.mxu0 0.0
    %294 = vmatprep.subr.mxu0 0.0
    %295 = vmatpush1.msra.mxu0 0.0
    %296 = vmatprep.subr.mxu0 0.0
    %297 = vmatpush1.msra.mxu0 0.0
    %298 = vmatprep.subr.mxu0 0.0
    %299 = vmatpush1.msra.mxu0 0.0
    %300 = vmatprep.subr.mxu0 0.0
    %301 = vmatpush1.msra.mxu0 0.0
    %302 = vmatprep.subr.mxu0 0.0
    %303 = vmatpush1.msra.mxu0 0.0
    %304 = vmatprep.subr.mxu0 0.0
    %305 = vmatpush1.msra.mxu0 0.0
    %306 = vmatprep.subr.mxu0 0.0
    %307 = vmatpush1.msra.mxu0 0.0
    %308 = vmatprep.subr.mxu0 0.0
    %309 = vmatpush1.msra.mxu0 0.0
    %310 = vmatprep.subr.mxu0 0.0
    %311 = vmatpush1.msra.mxu0 0.0
    %312 = vmatprep.subr.mxu0 0.0
    %313 = vmatpush1.msra.mxu0 0.0
    %314 = vmatprep.subr.mxu0 0.0
    %315 = vmatpush1.msra.mxu0 0.0
    %316 = vmatprep.subr.mxu0 0.0
    %317 = vmatpush1.msra.mxu0 0.0
    %318 = vmatprep.subr.mxu0 0.0
    %319 = vmatpush1.msra.mxu0 0.0
    %320 = vmatprep.mubr.f32.mxu0 0.0
    %321 = vmatmul.mubr.f32.gmra.mrb[0].mxu0 %v251
    %v322 = vpop.f32.mrb[0].mxu0
    %v323 = vadd.f32 0.0, %v322
    %v324 = vpop.f32.mrb[0].mxu0
    %325 = vmatprep.mubr.f32.mxu0 0.0
    %326 = vmatmul.mubr.f32.gmra.mrb[0].mxu0 %v254
    %v327 = vpop.f32.mrb[0].mxu0
    %v328 = vadd.f32 0.0, %v327
    %v329 = vpop.f32.mrb[0].mxu0
    %330 = vdwg.mxu0
    %331 = vmatprep.subr.mxu0 0.0
    %332 = vmatpush1.msra.mxu0 %v211
    %333 = vmatprep.subr.mxu0 0.0
    %334 = vmatpush1.msra.mxu0 %v216
    %335 = vmatprep.subr.mxu0 0.0
    %336 = vmatpush1.msra.mxu0 0.0
    %337 = vmatprep.subr.mxu0 0.0
    %338 = vmatpush1.msra.mxu0 0.0
    %339 = vmatprep.subr.mxu0 0.0
    %340 = vmatpush1.msra.mxu0 0.0
    %341 = vmatprep.subr.mxu0 0.0
    %342 = vmatpush1.msra.mxu0 0.0
    %343 = vmatprep.subr.mxu0 0.0
    %344 = vmatpush1.msra.mxu0 0.0
    %345 = vmatprep.subr.mxu0 0.0
    %346 = vmatpush1.msra.mxu0 0.0
    %347 = vmatprep.subr.mxu0 0.0
    %348 = vmatpush1.msra.mxu0 0.0
    %349 = vmatprep.subr.mxu0 0.0
    %350 = vmatpush1.msra.mxu0 0.0
    %351 = vmatprep.subr.mxu0 0.0
    %352 = vmatpush1.msra.mxu0 0.0
    %353 = vmatprep.subr.mxu0 0.0
    %354 = vmatpush1.msra.mxu0 0.0
    %355 = vmatprep.subr.mxu0 0.0
    %356 = vmatpush1.msra.mxu0 0.0
    %357 = vmatprep.subr.mxu0 0.0
    %358 = vmatpush1.msra.mxu0 0.0
    %359 = vmatprep.subr.mxu0 0.0
    %360 = vmatpush1.msra.mxu0 0.0
    %361 = vmatprep.subr.mxu0 0.0
    %362 = vmatpush1.msra.mxu0 0.0
    %363 = vmatprep.subr.mxu0 0.0
    %364 = vmatpush1.msra.mxu0 0.0
    %365 = vmatprep.subr.mxu0 0.0
    %366 = vmatpush1.msra.mxu0 0.0
    %367 = vmatprep.subr.mxu0 0.0
    %368 = vmatpush1.msra.mxu0 0.0
    %369 = vmatprep.subr.mxu0 0.0
    %370 = vmatpush1.msra.mxu0 0.0
    %371 = vmatprep.subr.mxu0 0.0
    %372 = vmatpush1.msra.mxu0 0.0
    %373 = vmatprep.subr.mxu0 0.0
    %374 = vmatpush1.msra.mxu0 0.0
    %375 = vmatprep.subr.mxu0 0.0
    %376 = vmatpush1.msra.mxu0 0.0
    %377 = vmatprep.subr.mxu0 0.0
    %378 = vmatpush1.msra.mxu0 0.0
    %379 = vmatprep.subr.mxu0 0.0
    %380 = vmatpush1.msra.mxu0 0.0
    %381 = vmatprep.subr.mxu0 0.0
    %382 = vmatpush1.msra.mxu0 0.0
    %383 = vmatprep.subr.mxu0 0.0
    %384 = vmatpush1.msra.mxu0 0.0
    %385 = vmatprep.subr.mxu0 0.0
    %386 = vmatpush1.msra.mxu0 0.0
    %387 = vmatprep.subr.mxu0 0.0
    %388 = vmatpush1.msra.mxu0 0.0
    %389 = vmatprep.subr.mxu0 0.0
    %390 = vmatpush1.msra.mxu0 0.0
    %391 = vmatprep.subr.mxu0 0.0
    %392 = vmatpush1.msra.mxu0 0.0
    %393 = vmatprep.subr.mxu0 0.0
    %394 = vmatpush1.msra.mxu0 0.0
    %395 = vmatprep.mubr.f32.mxu0 0.0
    %396 = vmatmul.mubr.f32.gmra.mrb[0].mxu0 %v251
    %v397 = vpop.f32.mrb[0].mxu0
    %v398 = vadd.f32 0.0, %v397
    %v399 = vpop.f32.mrb[0].mxu0
    %400 = vmatprep.mubr.f32.mxu0 0.0
    %401 = vmatmul.mubr.f32.gmra.mrb[0].mxu0 %v254
    %v402 = vpop.f32.mrb[0].mxu0
    %v403 = vadd.f32 0.0, %v402
    %v404 = vpop.f32.mrb[0].mxu0
    %405 = vdwg.mxu0
    %406 = vmatprep.subr.mxu0 0.0
    %407 = vmatpush1.msra.mxu0 %v221
    %408 = vmatprep.subr.mxu0 0.0
    %409 = vmatpush1.msra.mxu0 %v226
    %410 = vmatprep.subr.mxu0 0.0
    %411 = vmatpush1.msra.mxu0 0.0
    %412 = vmatprep.subr.mxu0 0.0
    %413 = vmatpush1.msra.mxu0 0.0
    %414 = vmatprep.subr.mxu0 0.0
    %415 = vmatpush1.msra.mxu0 0.0
    %416 = vmatprep.subr.mxu0 0.0
    %417 = vmatpush1.msra.mxu0 0.0
    %418 = vmatprep.subr.mxu0 0.0
    %419 = vmatpush1.msra.mxu0 0.0
    %420 = vmatprep.subr.mxu0 0.0
    %421 = vmatpush1.msra.mxu0 0.0
    %422 = vmatprep.subr.mxu0 0.0
    %423 = vmatpush1.msra.mxu0 0.0
    %424 = vmatprep.subr.mxu0 0.0
    %425 = vmatpush1.msra.mxu0 0.0
    %426 = vmatprep.subr.mxu0 0.0
    %427 = vmatpush1.msra.mxu0 0.0
    %428 = vmatprep.subr.mxu0 0.0
    %429 = vmatpush1.msra.mxu0 0.0
    %430 = vmatprep.subr.mxu0 0.0
    %431 = vmatpush1.msra.mxu0 0.0
    %432 = vmatprep.subr.mxu0 0.0
    %433 = vmatpush1.msra.mxu0 0.0
    %434 = vmatprep.subr.mxu0 0.0
    %435 = vmatpush1.msra.mxu0 0.0
    %436 = vmatprep.subr.mxu0 0.0
    %437 = vmatpush1.msra.mxu0 0.0
    %438 = vmatprep.subr.mxu0 0.0
    %439 = vmatpush1.msra.mxu0 0.0
    %440 = vmatprep.subr.mxu0 0.0
    %441 = vmatpush1.msra.mxu0 0.0
    %442 = vmatprep.subr.mxu0 0.0
    %443 = vmatpush1.msra.mxu0 0.0
    %444 = vmatprep.subr.mxu0 0.0
    %445 = vmatpush1.msra.mxu0 0.0
    %446 = vmatprep.subr.mxu0 0.0
    %447 = vmatpush1.msra.mxu0 0.0
    %448 = vmatprep.subr.mxu0 0.0
    %449 = vmatpush1.msra.mxu0 0.0
    %450 = vmatprep.subr.mxu0 0.0
    %451 = vmatpush1.msra.mxu0 0.0
    %452 = vmatprep.subr.mxu0 0.0
    %453 = vmatpush1.msra.mxu0 0.0
    %454 = vmatprep.subr.mxu0 0.0
    %455 = vmatpush1.msra.mxu0 0.0
    %456 = vmatprep.subr.mxu0 0.0
    %457 = vmatpush1.msra.mxu0 0.0
    %458 = vmatprep.subr.mxu0 0.0
    %459 = vmatpush1.msra.mxu0 0.0
    %460 = vmatprep.subr.mxu0 0.0
    %461 = vmatpush1.msra.mxu0 0.0
    %462 = vmatprep.subr.mxu0 0.0
    %463 = vmatpush1.msra.mxu0 0.0
    %464 = vmatprep.subr.mxu0 0.0
    %465 = vmatpush1.msra.mxu0 0.0
    %466 = vmatprep.subr.mxu0 0.0
    %467 = vmatpush1.msra.mxu0 0.0
    %468 = vmatprep.subr.mxu0 0.0
    %469 = vmatpush1.msra.mxu0 0.0
    %470 = vmatprep.mubr.f32.mxu0 0.0
    %471 = vmatmul.mubr.f32.gmra.mrb[0].mxu0 %v251
    %v472 = vpop.f32.mrb[0].mxu0
    %v473 = vadd.f32 0.0, %v472
    %v474 = vpop.f32.mrb[0].mxu0
    %475 = vmatprep.mubr.f32.mxu0 0.0
    %476 = vmatmul.mubr.f32.gmra.mrb[0].mxu0 %v254
    %v477 = vpop.f32.mrb[0].mxu0
    %v478 = vadd.f32 0.0, %v477
    %v479 = vpop.f32.mrb[0].mxu0
    %480 = vdwg.mxu0
    %481 = vmatprep.subr.mxu0 0.0
    %482 = vmatpush1.msra.mxu0 %v231
    %483 = vmatprep.subr.mxu0 0.0
    %484 = vmatpush1.msra.mxu0 %v236
    %485 = vmatprep.subr.mxu0 0.0
    %486 = vmatpush1.msra.mxu0 0.0
    %487 = vmatprep.subr.mxu0 0.0
    %488 = vmatpush1.msra.mxu0 0.0
    %489 = vmatprep.subr.mxu0 0.0
    %490 = vmatpush1.msra.mxu0 0.0
    %491 = vmatprep.subr.mxu0 0.0
    %492 = vmatpush1.msra.mxu0 0.0
    %493 = vmatprep.subr.mxu0 0.0
    %494 = vmatpush1.msra.mxu0 0.0
    %495 = vmatprep.subr.mxu0 0.0
    %496 = vmatpush1.msra.mxu0 0.0
    %497 = vmatprep.subr.mxu0 0.0
    %498 = vmatpush1.msra.mxu0 0.0
    %499 = vmatprep.subr.mxu0 0.0
    %500 = vmatpush1.msra.mxu0 0.0
    %501 = vmatprep.subr.mxu0 0.0
    %502 = vmatpush1.msra.mxu0 0.0
    %503 = vmatprep.subr.mxu0 0.0
    %504 = vmatpush1.msra.mxu0 0.0
    %505 = vmatprep.subr.mxu0 0.0
    %506 = vmatpush1.msra.mxu0 0.0
    %507 = vmatprep.subr.mxu0 0.0
    %508 = vmatpush1.msra.mxu0 0.0
    %509 = vmatprep.subr.mxu0 0.0
    %510 = vmatpush1.msra.mxu0 0.0
    %511 = vmatprep.subr.mxu0 0.0
    %512 = vmatpush1.msra.mxu0 0.0
    %513 = vmatprep.subr.mxu0 0.0
    %514 = vmatpush1.msra.mxu0 0.0
    %515 = vmatprep.subr.mxu0 0.0
    %516 = vmatpush1.msra.mxu0 0.0
    %517 = vmatprep.subr.mxu0 0.0
    %518 = vmatpush1.msra.mxu0 0.0
    %519 = vmatprep.subr.mxu0 0.0
    %520 = vmatpush1.msra.mxu0 0.0
    %521 = vmatprep.subr.mxu0 0.0
    %522 = vmatpush1.msra.mxu0 0.0
    %523 = vmatprep.subr.mxu0 0.0
    %524 = vmatpush1.msra.mxu0 0.0
    %525 = vmatprep.subr.mxu0 0.0
    %526 = vmatpush1.msra.mxu0 0.0
    %527 = vmatprep.subr.mxu0 0.0
    %528 = vmatpush1.msra.mxu0 0.0
    %529 = vmatprep.subr.mxu0 0.0
    %530 = vmatpush1.msra.mxu0 0.0
    %531 = vmatprep.subr.mxu0 0.0
    %532 = vmatpush1.msra.mxu0 0.0
    %533 = vmatprep.subr.mxu0 0.0
    %534 = vmatpush1.msra.mxu0 0.0
    %535 = vmatprep.subr.mxu0 0.0
    %536 = vmatpush1.msra.mxu0 0.0
    %537 = vmatprep.subr.mxu0 0.0
    %538 = vmatpush1.msra.mxu0 0.0
    %539 = vmatprep.subr.mxu0 0.0
    %540 = vmatpush1.msra.mxu0 0.0
    %541 = vmatprep.subr.mxu0 0.0
    %542 = vmatpush1.msra.mxu0 0.0
    %543 = vmatprep.subr.mxu0 0.0
    %544 = vmatpush1.msra.mxu0 0.0
    %545 = vmatprep.mubr.f32.mxu0 0.0
    %546 = vmatmul.mubr.f32.gmra.mrb[0].mxu0 %v251
    %v547 = vpop.f32.mrb[0].mxu0
    %v548 = vadd.f32 0.0, %v547
    %v549 = vpop.f32.mrb[0].mxu0
    %550 = vmatprep.mubr.f32.mxu0 0.0
    %551 = vmatmul.mubr.f32.gmra.mrb[0].mxu0 %v254
    %v552 = vpop.f32.mrb[0].mxu0
    %v553 = vadd.f32 0.0, %v552
    %v554 = vpop.f32.mrb[0].mxu0
    %555 = vdwg.mxu0
    %556 = vmatprep.subr.mxu0 0.0
    %557 = vmatpush1.msra.mxu0 %v241
    %558 = vmatprep.subr.mxu0 0.0
    %559 = vmatpush1.msra.mxu0 %v246
    %560 = vmatprep.subr.mxu0 0.0
    %561 = vmatpush1.msra.mxu0 0.0
    %562 = vmatprep.subr.mxu0 0.0
    %563 = vmatpush1.msra.mxu0 0.0
    %564 = vmatprep.subr.mxu0 0.0
    %565 = vmatpush1.msra.mxu0 0.0
    %566 = vmatprep.subr.mxu0 0.0
    %567 = vmatpush1.msra.mxu0 0.0
    %568 = vmatprep.subr.mxu0 0.0
    %569 = vmatpush1.msra.mxu0 0.0
    %570 = vmatprep.subr.mxu0 0.0
    %571 = vmatpush1.msra.mxu0 0.0
    %572 = vmatprep.subr.mxu0 0.0
    %573 = vmatpush1.msra.mxu0 0.0
    %574 = vmatprep.subr.mxu0 0.0
    %575 = vmatpush1.msra.mxu0 0.0
    %576 = vmatprep.subr.mxu0 0.0
    %577 = vmatpush1.msra.mxu0 0.0
    %578 = vmatprep.subr.mxu0 0.0
    %579 = vmatpush1.msra.mxu0 0.0
    %580 = vmatprep.subr.mxu0 0.0
    %581 = vmatpush1.msra.mxu0 0.0
    %582 = vmatprep.subr.mxu0 0.0
    %583 = vmatpush1.msra.mxu0 0.0
    %584 = vmatprep.subr.mxu0 0.0
    %585 = vmatpush1.msra.mxu0 0.0
    %586 = vmatprep.subr.mxu0 0.0
    %587 = vmatpush1.msra.mxu0 0.0
    %588 = vmatprep.subr.mxu0 0.0
    %589 = vmatpush1.msra.mxu0 0.0
    %590 = vmatprep.subr.mxu0 0.0
    %591 = vmatpush1.msra.mxu0 0.0
    %592 = vmatprep.subr.mxu0 0.0
    %593 = vmatpush1.msra.mxu0 0.0
    %594 = vmatprep.subr.mxu0 0.0
    %595 = vmatpush1.msra.mxu0 0.0
    %596 = vmatprep.subr.mxu0 0.0
    %597 = vmatpush1.msra.mxu0 0.0
    %598 = vmatprep.subr.mxu0 0.0
    %599 = vmatpush1.msra.mxu0 0.0
    %600 = vmatprep.subr.mxu0 0.0
    %601 = vmatpush1.msra.mxu0 0.0
    %602 = vmatprep.subr.mxu0 0.0
    %603 = vmatpush1.msra.mxu0 0.0
    %604 = vmatprep.subr.mxu0 0.0
    %605 = vmatpush1.msra.mxu0 0.0
    %606 = vmatprep.subr.mxu0 0.0
    %607 = vmatpush1.msra.mxu0 0.0
    %608 = vmatprep.subr.mxu0 0.0
    %609 = vmatpush1.msra.mxu0 0.0
    %610 = vmatprep.subr.mxu0 0.0
    %611 = vmatpush1.msra.mxu0 0.0
    %612 = vmatprep.subr.mxu0 0.0
    %613 = vmatpush1.msra.mxu0 0.0
    %614 = vmatprep.subr.mxu0 0.0
    %615 = vmatpush1.msra.mxu0 0.0
    %616 = vmatprep.subr.mxu0 0.0
    %617 = vmatpush1.msra.mxu0 0.0
    %618 = vmatprep.subr.mxu0 0.0
    %619 = vmatpush1.msra.mxu0 0.0
    %620 = vmatprep.mubr.f32.mxu0 0.0
    %621 = vmatmul.mubr.f32.gmra.mrb[0].mxu0 %v251
    %v622 = vpop.f32.mrb[0].mxu0
    %v623 = vadd.f32 0.0, %v622
    %v624 = vpop.f32.mrb[0].mxu0
    %625 = vmatprep.mubr.f32.mxu0 0.0
    %626 = vmatmul.mubr.f32.gmra.mrb[0].mxu0 %v254
    %v627 = vpop.f32.mrb[0].mxu0
    %v628 = vadd.f32 0.0, %v627
    %v629 = vpop.f32.mrb[0].mxu0
    %630 = vdwg.mxu0
    %v631 = vmul.f32 %v323, %v323
    %v632 = vmul.f32 %v328, %v328
    %v633 = vmul.f32 %v398, %v398
    %v634 = vmul.f32 %v403, %v403
    %v635 = vmul.f32 %v323, %v398
    %v636 = vmul.f32 %v328, %v403
    %v637 = vsub.f32 %v473, %v631
    %v638 = vsub.f32 %v478, %v632
    %v639 = vsub.f32 %v548, %v633
    %v640 = vsub.f32 %v553, %v634
    %v641 = vsub.f32 %v623, %v635
    %v642 = vsub.f32 %v628, %v636
    %v643 = vmul.f32 %v635, 2.0
    %v644 = vmul.f32 %v636, 2.0
    %v645 = vadd.f32 %v643, 0.0001
    %v646 = vadd.f32 %v644, 0.0001
    %v647 = vmul.f32 %v641, 2.0
    %v648 = vmul.f32 %v642, 2.0
    %v649 = vadd.f32 %v647, 0.0009
    %v650 = vadd.f32 %v648, 0.0009
    %v651 = vmul.f32 %v645, %v649
    %v652 = vmul.f32 %v646, %v650
    %v653 = vadd.f32 %v631, %v633
    %v654 = vadd.f32 %v632, %v634
    %v655 = vadd.f32 %v653, 0.0001
    %v656 = vadd.f32 %v654, 0.0001
    %v657 = vadd.f32 %v637, %v639
    %v658 = vadd.f32 %v638, %v640
    %v659 = vadd.f32 %v657, 0.0009
    %v660 = vadd.f32 %v658, 0.0009
    %v661 = vmul.f32 %v655, %v659
    %v662 = vmul.f32 %v656, %v660
    %v663 = vrcp.pop %v661
    %v664 = vrcp.pop %v662
    %v665 = vmul.f32 %v651, %v663
    %v666 = vmul.f32 %v652, %v664
    %v667 = vadd.f32 %v665, %v666
    %668 = vadd.xlane.f32.xlu0 %v667
    %v669 = vpop.xlane.xlu0 %668
    %v670 = vrot.slane %v669, 4
    %v671 = vadd.f32 %v669, %v670
    %v672 = vrot.slane %v671, 2
    %v673 = vadd.f32 %v671, %v672
    %v674 = vrot.slane %v673, 1
    %v675 = vadd.f32 %v673, %v674
    %s676 = vtos %v675
    %s677 = sadd.f32 %s676, 0.0
    %v678 = vstv %s109
    %vm679 = vcmask 0
    %680 = vst.msk [vmem:[#allocation10] sm:$0x1] %vm679, %v678
    %v681 = vstv %s677
    %682 = vst.msk [vmem:[#allocation11] sm:$0x1] %vm679, %v681
    // Predicated region
    $region34: #{tpu_custom_call.1} parent=1 // pred_check
      _
    $region35: #{tpu_custom_call.1} parent=1 // pred_check_branch
      %684 = sbr.rel (0) target = $region37
    $region36: #{tpu_custom_call.1} parent=1 // pred_region
      %s686 = ssub.s32 16, 16
      %687 = vsyncadd [#allocation4], %s686
      %s689 = sshll.u32 [#allocation10], 4
      %s690 = int_to_ptr.vmem [resolvable:$true] %s689
      %692 = dma.vmem_to_hbm [thread:$0]  %s690, 16, %s4, [#allocation4]
    $region37: #{tpu_custom_call.1} parent=1 // pred_fallthru
      _
    // Predicated region
    $region38: #{tpu_custom_call.1} parent=1 // pred_check
      _
    $region39: #{tpu_custom_call.1} parent=1 // pred_check_branch
      %694 = sbr.rel (0) target = $region41
    $region40: #{tpu_custom_call.1} parent=1 // pred_region
      %s696 = ssub.s32 16, 16
      %697 = vsyncadd [#allocation12], %s696
      %s699 = sshll.u32 [#allocation11], 4
      %s700 = int_to_ptr.vmem [resolvable:$true] %s699
      %702 = dma.vmem_to_hbm [thread:$0]  %s700, 16, %s5, [#allocation12]
    $region41: #{tpu_custom_call.1} parent=1 // pred_fallthru
      _
    // Predicated region
    $region42: #{tpu_custom_call.1} parent=1 // pred_check
      _
    $region43: #{tpu_custom_call.1} parent=1 // pred_check_branch
      %704 = sbr.rel (0) target = $region45
    $region44: #{tpu_custom_call.1} parent=1 // pred_region
      %705 = dma.done [#allocation4], 16
    $region45: #{tpu_custom_call.1} parent=1 // pred_fallthru
      _
    // Predicated region
    $region46: #{tpu_custom_call.1} parent=1 // pred_check
      _
    $region47: #{tpu_custom_call.1} parent=1 // pred_check_branch
      %707 = sbr.rel (0) target = $region49
    $region48: #{tpu_custom_call.1} parent=1 // pred_region
      %708 = dma.done [#allocation12], 16
    $region49: #{tpu_custom_call.1} parent=1 // pred_fallthru
      _
    %709 = vsyncpa [#allocation3], 1
    %710 = vsyncpa [#allocation6], 1
    %711 = vsyncpa [#allocation9], 1
    %712 = vsyncpa [#allocation4], 1
    %713 = vsyncpa [#allocation12], 1

</llo_original>
